<compile_context>
chip_gen: v6e
topology: v6e:2x2x1
jax: 0.10.0
libtpu: 0.0.40
codegen_flags: <defaults>
</compile_context>

<pallas_src>
import functools

import jax
import jax.numpy as jnp
from jax.experimental import pallas as pl
from jax.experimental.pallas import tpu as pltpu

_LANES = 128
_BLOCK_BYTES = 2 * 1024 * 1024   # ~2 MiB per input block (per perf review)
_MAX_PARTIALS = 2                # one partial-sum slab per TensorCore (v7x)


def _round_up(x, m):
    return ((x + m - 1) // m) * m


def _min_row_align(dtype):
    # f32 -> 8 sublanes, bf16 -> 16, int8/fp8 -> 32 (sublane packing).
    itemsize = jnp.dtype(dtype).itemsize
    return max(8, 32 // itemsize)


def _mse_partial_kernel(pred_ref, true_ref, out_ref, *,
                        blocks_per, rows, full_blocks, need_mask):
    """Accumulates sum((pred - true)^2) per (sublane, lane) into out_ref."""
    s = pl.program_id(0)   # parallel axis (per-core partial slab)
    j = pl.program_id(1)   # reduction axis over row-blocks

    @pl.when(j == 0)
    def _():
        out_ref[...] = jnp.zeros_like(out_ref)

    tile_rows = pred_ref.shape[0]

    def accumulate(sq):
        # Fold (tile_rows, 128) -> (8, 128) with pure elementwise (VPU) adds;
        # reshape only splits the sublane-major dim, so it is layout-trivial.
        partial = sq.reshape(tile_rows // 8, 8, _LANES).sum(axis=0)
        out_ref[...] = out_ref[...] + partial[None, :, :]

    def fast():
        d = pred_ref[...].astype(jnp.float32) - true_ref[...].astype(jnp.float32)
        accumulate(d * d)

    if not need_mask:
        # Trace-time specialization: every logical block is fully in range,
        # so the hot loop carries zero iota / compare / select work.
        fast()
    else:
        logical_block = s * blocks_per + j

        @pl.when(logical_block < full_blocks)
        def _():
            fast()

        @pl.when(logical_block >= full_blocks)
        def _():
            # Row-granular tail mask only (lane padding never reaches the
            # kernel; the <128-elem remainder is summed in the wrapper).
            # Rows >= `rows` are either ragged-DMA garbage or belong to a
            # clamped duplicate block and must contribute exactly 0.
            start_row = logical_block * tile_rows
            row_ids = start_row + jax.lax.broadcasted_iota(
                jnp.int32, (tile_rows, _LANES), 0)
            mask = row_ids < rows
            d = pred_ref[...].astype(jnp.float32) - true_ref[...].astype(jnp.float32)
            accumulate(jnp.where(mask, d * d, jnp.float32(0.0)))


def pose_loss(predicted_state, true_state):
    """MSE(predicted_state, true_state) with mean reduction (scalar f32)."""
    assert predicted_state.shape == true_state.shape, "shapes must match"
    n = predicted_state.size
    if n == 0:
        # Matches torch nn.MSELoss(reduction='mean') on empty input (NaN).
        return jnp.float32(jnp.nan)

    pred_flat = jnp.ravel(predicted_state)
    true_flat = jnp.ravel(true_state)

    # Lane-misaligned remainder (<=127 elems): tiny XLA-level sum in the
    # wrapper instead of a full-tensor pad copy.
    rem = n % _LANES
    aligned = n - rem
    rem_sum = jnp.float32(0.0)
    if rem:
        dr = (pred_flat[aligned:].astype(jnp.float32)
              - true_flat[aligned:].astype(jnp.float32))
        rem_sum = jnp.sum(dr * dr)

    rows = aligned // _LANES
    if rows == 0:
        return rem_sum / n

    pred2d = pred_flat[:aligned].reshape(rows, _LANES)
    true2d = true_flat[:aligned].reshape(rows, _LANES)

    # ~2 MiB per input block, rounded to sublane alignment for both dtypes.
    align = max(_min_row_align(pred2d.dtype), _min_row_align(true2d.dtype))
    max_itemsize = max(jnp.dtype(pred2d.dtype).itemsize,
                       jnp.dtype(true2d.dtype).itemsize)
    budget_rows = max(align,
                      (_BLOCK_BYTES // (_LANES * max_itemsize)) // align * align)
    tile_rows = min(budget_rows, _round_up(rows, align))

    total_blocks = pl.cdiv(rows, tile_rows)
    n_partials = _MAX_PARTIALS if total_blocks >= _MAX_PARTIALS else 1
    blocks_per = pl.cdiv(total_blocks, n_partials)
    full_blocks = rows // tile_rows                 # fully in-range blocks
    need_mask = full_blocks != n_partials * blocks_per

    if n_partials * blocks_per == total_blocks:
        def in_map(s, j):
            return (s * blocks_per + j, 0)
    else:
        last = total_blocks - 1

        def in_map(s, j):
            # Clamp so the DMA'd block is always in range; duplicated logical
            # blocks are zeroed by the in-kernel row mask.
            return (jnp.minimum(s * blocks_per + j, last), 0)

    out = pl.pallas_call(
        functools.partial(_mse_partial_kernel, blocks_per=blocks_per,
                          rows=rows, full_blocks=full_blocks,
                          need_mask=need_mask),
        out_shape=jax.ShapeDtypeStruct((n_partials, 8, _LANES), jnp.float32),
        grid_spec=pltpu.PrefetchScalarGridSpec(
            num_scalar_prefetch=0,
            grid=(n_partials, blocks_per),
            in_specs=[
                pl.BlockSpec((tile_rows, _LANES), in_map),
                pl.BlockSpec((tile_rows, _LANES), in_map),
            ],
            out_specs=pl.BlockSpec((1, 8, _LANES), lambda s, j: (s, 0, 0)),
        ),
        compiler_params=pltpu.CompilerParams(
            # TODO(synk): if a v7x profile shows one TensorCore idle, switch
            # the leading axis to pltpu.CORE_PARALLEL (per-core output slabs
            # are already private).
            dimension_semantics=("parallel", "arbitrary"),
        ),
    )(pred2d, true2d)

    # Tiny final reduce (n_partials x 8 x 128 f32) + mean normalization.
    return (jnp.sum(out) + rem_sum) / n


if __name__ == "__main__":
    key = jax.random.PRNGKey(0)
    k1, k2, k3, k4, k5, k6 = jax.random.split(key, 6)

    # "Pose / state" style inputs (PoseLoss accepts any matching shapes).
    x_shape = (2, 4, 16, 16)
    predicted_state = jax.random.normal(k1, x_shape, dtype=jnp.float32)
    true_state = jax.random.normal(k2, x_shape, dtype=jnp.float32)

    loss = pose_loss(predicted_state, true_state)
    jax.block_until_ready(loss)
    ref = jnp.mean((predicted_state - true_state) ** 2)
    assert jnp.allclose(loss, ref, rtol=1e-5, atol=1e-6), (loss, ref)

    # Non-lane-aligned shape exercises the wrapper remainder + row-mask path.
    y_shape = (5, 201)
    p2 = jax.random.normal(k3, y_shape, dtype=jnp.float32)
    t2 = jax.random.normal(k4, y_shape, dtype=jnp.float32)
    loss2 = pose_loss(p2, t2)
    jax.block_until_ready(loss2)
    ref2 = jnp.mean((p2 - t2) ** 2)
    assert jnp.allclose(loss2, ref2, rtol=1e-5, atol=1e-6), (loss2, ref2)

    # Multi-block shape exercises fast path + ragged tail + clamped duplicate
    # blocks across both partial-sum slabs.
    z_shape = (4100, 256)
    p3 = jax.random.normal(k5, z_shape, dtype=jnp.float32)
    t3 = jax.random.normal(k6, z_shape, dtype=jnp.float32)
    loss3 = pose_loss(p3, t3)
    jax.block_until_ready(loss3)
    ref3 = jnp.mean((p3 - t3) ** 2)
    assert jnp.allclose(loss3, ref3, rtol=1e-4, atol=1e-6), (loss3, ref3)

    print("KERNEL_OK")
</pallas_src>

<mosaic_0001>
module attributes {stable_mosaic.version = 11 : i64} {
  func.func @_mse_partial_kernel(%arg0: i32, %arg1: i32, %arg2: memref<16x128xf32, #tpu.memory_space<vmem>>, %arg3: memref<16x128xf32, #tpu.memory_space<vmem>>, %arg4: memref<1x8x128xf32, #tpu.memory_space<vmem>>) attributes {dimension_semantics = [#tpu.dimension_semantics<parallel>, #tpu.dimension_semantics<arbitrary>], iteration_bounds = array<i64: 1, 1>, scalar_prefetch = 0 : i64, scratch_operands = 0 : i64, tpu.core_type = #tpu.core_type<tc>, window_params = [{transform_indices = @transform_0, window_bounds = array<i64: 16, 128>}, {transform_indices = @transform_1, window_bounds = array<i64: 16, 128>}, {transform_indices = @transform_2, window_bounds = array<i64: 1, 8, 128>}]} {
    %c0_i32 = arith.constant 0 : i32
    %0 = arith.cmpi eq, %arg1, %c0_i32 : i32
    %1 = arith.extui %0 : i1 to i32
    %c0_i32_0 = arith.constant 0 : i32
    %2 = arith.cmpi ne, %1, %c0_i32_0 : i32
    scf.if %2 {
      %cst_10 = arith.constant 0.000000e+00 : f32
      %13 = vector.broadcast %cst_10 : f32 to vector<1x8x128xf32>
      %c0_11 = arith.constant 0 : index
      %c0_12 = arith.constant 0 : index
      %c0_13 = arith.constant 0 : index
      %14 = vector.load %arg4[%c0_11, %c0_12, %c0_13] : memref<1x8x128xf32, #tpu.memory_space<vmem>>, vector<1x8x128xf32>
      tpu.vector_store %arg4[%c0_11, %c0_12, %c0_13], %13 {strides = array<i32>} : memref<1x8x128xf32, #tpu.memory_space<vmem>>, vector<1x8x128xf32>,
    } else {
    }
    %c0 = arith.constant 0 : index
    %c0_1 = arith.constant 0 : index
    %3 = vector.load %arg2[%c0, %c0_1] : memref<16x128xf32, #tpu.memory_space<vmem>>, vector<16x128xf32>
    %c0_2 = arith.constant 0 : index
    %c0_3 = arith.constant 0 : index
    %4 = vector.load %arg3[%c0_2, %c0_3] : memref<16x128xf32, #tpu.memory_space<vmem>>, vector<16x128xf32>
    %5 = arith.subf %3, %4 : vector<16x128xf32>
    %6 = arith.mulf %5, %5 : vector<16x128xf32>
    %7 = vector.shape_cast %6 : vector<16x128xf32> to vector<2x8x128xf32>
    %cst = arith.constant dense<0.000000e+00> : vector<8x128xf32>
    %8 = vector.multi_reduction <add>, %7, %cst [0] : vector<2x8x128xf32> to vector<8x128xf32>
    %c0_4 = arith.constant 0 : index
    %c0_5 = arith.constant 0 : index
    %c0_6 = arith.constant 0 : index
    %9 = vector.load %arg4[%c0_4, %c0_5, %c0_6] : memref<1x8x128xf32, #tpu.memory_space<vmem>>, vector<1x8x128xf32>
    %10 = vector.shape_cast %8 : vector<8x128xf32> to vector<1x8x128xf32>
    %11 = arith.addf %9, %10 : vector<1x8x128xf32>
    %c0_7 = arith.constant 0 : index
    %c0_8 = arith.constant 0 : index
    %c0_9 = arith.constant 0 : index
    %12 = vector.load %arg4[%c0_7, %c0_8, %c0_9] : memref<1x8x128xf32, #tpu.memory_space<vmem>>, vector<1x8x128xf32>
    tpu.vector_store %arg4[%c0_7, %c0_8, %c0_9], %11 {strides = array<i32>} : memref<1x8x128xf32, #tpu.memory_space<vmem>>, vector<1x8x128xf32>,
    return
  }
  func.func @transform_0(%arg0: i32, %arg1: i32) -> (i32, i32) {
    %c1_i32 = arith.constant 1 : i32
    %0 = arith.muli %arg0, %c1_i32 : i32
    %1 = arith.addi %0, %arg1 : i32
    %c0_i32 = arith.constant 0 : i32
    %c0_i32_0 = arith.constant 0 : i32
    return %1, %c0_i32 : i32, i32
  }
  func.func @transform_1(%arg0: i32, %arg1: i32) -> (i32, i32) {
    %c1_i32 = arith.constant 1 : i32
    %0 = arith.muli %arg0, %c1_i32 : i32
    %1 = arith.addi %0, %arg1 : i32
    %c0_i32 = arith.constant 0 : i32
    %c0_i32_0 = arith.constant 0 : i32
    return %1, %c0_i32 : i32, i32
  }
  func.func @transform_2(%arg0: i32, %arg1: i32) -> (i32, i32, i32) {
    %c0_i32 = arith.constant 0 : i32
    %c0_i32_0 = arith.constant 0 : i32
    %c0_i32_1 = arith.constant 0 : i32
    return %arg0, %c0_i32, %c0_i32_0 : i32, i32, i32
  }
}

</mosaic_0001>

<llo_original>
// kernel: tpu_custom_call.1
$region0: #{tpu_custom_call.1}
  #allocation0 [shape = 'u32[]', space=smem, size = 0x4, offset = 0x4, fixed_abs, tag = 'smem constant byte address 0x4 - core index']
  #allocation1 [shape = 'u32[144,128]{1,0:T(1,128)}', space=vmem, size = 0x12000, scoped, tag = 'internal scratch']
  %s0 = inlined_call_operand.hbm [shape: f32[16,128], index: 0, kind: input, shape index: {}]
  %s1 = inlined_call_operand.hbm [shape: f32[16,128], index: 1, kind: input, shape index: {}]
  %s2 = inlined_call_operand.hbm [shape: f32[1,8,128], index: 2, kind: output, shape index: {}]
  %s3 = sld [smem:[#allocation0]]
  $region30: #{tpu_custom_call.1} parent=0
    _
  %s5 = ssub.s32 1, %s3
  %s6 = scalar_select 0, %s5, %s3
  $region1: #{tpu_custom_call.1} parent=0
    #allocation2 [shape = 'u8[8192]{0}', space=vmem, size = 0x2000, scoped, tag = 'input window, operand 0, single buffered']
    #allocation3 [shape = 's32[1]{0}', space=sflag, size = 0x4, scoped, tag = 'scoped memory for tpu_custom_call.1']
    #allocation4 [shape = 's32[1]{0}', space=sflag, size = 0x4, scoped, tag = 'scoped memory for tpu_custom_call.1']
    #allocation5 [shape = 'u8[8192]{0}', space=vmem, size = 0x2000, scoped, tag = 'input window, operand 1, single buffered']
    #allocation6 [shape = 's32[1]{0}', space=sflag, size = 0x4, scoped, tag = 'scoped memory for tpu_custom_call.1']
    #allocation7 [shape = 'u8[4096]{0}', space=vmem, size = 0x1000, scoped, tag = 'output window, operand 0, single buffered']
    %7 = vsyncpa [#allocation3], 0
    %8 = vsyncpa [#allocation6], 0
    %9 = vsyncpa [#allocation4], 0
    // Predicated region
    $region2: #{tpu_custom_call.1} parent=1 // pred_check
      _
    $region3: #{tpu_custom_call.1} parent=1 // pred_check_branch
      %11 = sbr.rel (0) target = $region5
    $region4: #{tpu_custom_call.1} parent=1 // pred_region
      %s12 = sadd.s32 0, 0
      %s13 = smul.u32 2, %s12
      %s15 = ssub.s32 256, 256
      %16 = vsyncadd [#allocation3], %s15
      %s17 = smul.addr %s13, 128
      %s18 = scalar_lea.hbm %s0, %s17
      %s19 = sshll.u32 [#allocation2], 4
      %s20 = int_to_ptr.vmem [resolvable:$true] %s19
      %25 = dma.hbm_to_vmem [thread:$0]  %s18, 256, %s20, [#allocation3], 128, 128, 8
    $region5: #{tpu_custom_call.1} parent=1 // pred_fallthru
      _
    // Predicated region
    $region6: #{tpu_custom_call.1} parent=1 // pred_check
      _
    $region7: #{tpu_custom_call.1} parent=1 // pred_check_branch
      %27 = sbr.rel (0) target = $region9
    $region8: #{tpu_custom_call.1} parent=1 // pred_region
      %s28 = sadd.s32 0, 0
      %s29 = smul.u32 2, %s28
      %s31 = ssub.s32 256, 256
      %32 = vsyncadd [#allocation6], %s31
      %s33 = smul.addr %s29, 128
      %s34 = scalar_lea.hbm %s1, %s33
      %s35 = sshll.u32 [#allocation5], 4
      %s36 = int_to_ptr.vmem [resolvable:$true] %s35
      %41 = dma.hbm_to_vmem [thread:$0]  %s34, 256, %s36, [#allocation6], 128, 128, 8
    $region9: #{tpu_custom_call.1} parent=1 // pred_fallthru
      _
    // Predicated region
    $region10: #{tpu_custom_call.1} parent=1 // pred_check
      _
    $region11: #{tpu_custom_call.1} parent=1 // pred_check_branch
      %43 = sbr.rel (0) target = $region13
    $region12: #{tpu_custom_call.1} parent=1 // pred_region
      %44 = dma.done [#allocation3], 256
    $region13: #{tpu_custom_call.1} parent=1 // pred_fallthru
      _
    // Predicated region
    $region14: #{tpu_custom_call.1} parent=1 // pred_check
      _
    $region15: #{tpu_custom_call.1} parent=1 // pred_check_branch
      %46 = sbr.rel (0) target = $region17
    $region16: #{tpu_custom_call.1} parent=1 // pred_region
      %47 = dma.done [#allocation6], 256
    $region17: #{tpu_custom_call.1} parent=1 // pred_fallthru
      _
    %s48 = sadd.s32 0, 0
    %s49 = smul.u32 2, %s48
    %s50 = sadd.s32 0, 0
    %s51 = smul.u32 2, %s50
    %p52 = scmp.eq.s32.totalorder 0, 0
    // Predicated region
    $region18: #{tpu_custom_call.1} parent=1 // pred_check
      %p53 = pneg %p52
    $region19: #{tpu_custom_call.1} parent=1 // pred_check_branch
      %55 = sbr.rel (%p53) target = $region21
    $region20: #{tpu_custom_call.1} parent=1 // pred_region
      %56 = vst [vmem:[#allocation7] sm:$0xff] 0.0
    $region21: #{tpu_custom_call.1} parent=1 // pred_fallthru
      _
    %v57 = vld [vmem:[#allocation2] sm:$0xff]
    %v58 = vld [vmem:[#allocation2 + $0x8] sm:$0xff]
    %v59 = vld [vmem:[#allocation5] sm:$0xff]
    %v60 = vld [vmem:[#allocation5 + $0x8] sm:$0xff]
    %v61 = vsub.f32 %v57, %v59
    %v62 = vsub.f32 %v58, %v60
    %v63 = vmul.f32 %v61, %v61
    %v64 = vmul.f32 %v62, %v62
    %v65 = vadd.f32 %v63, %v64
    %v66 = vld [vmem:[#allocation7] sm:$0xff]
    %v67 = vadd.f32 %v66, %v65
    %68 = vst [vmem:[#allocation7] sm:$0xff] %v67
    // Predicated region
    $region22: #{tpu_custom_call.1} parent=1 // pred_check
      _
    $region23: #{tpu_custom_call.1} parent=1 // pred_check_branch
      %70 = sbr.rel (0) target = $region25
    $region24: #{tpu_custom_call.1} parent=1 // pred_region
      %s72 = ssub.s32 128, 128
      %73 = vsyncadd [#allocation4], %s72
      %s75 = sshll.u32 [#allocation7], 4
      %s76 = int_to_ptr.vmem [resolvable:$true] %s75
      %78 = dma.vmem_to_hbm [thread:$0]  %s76, 128, %s2, [#allocation4]
    $region25: #{tpu_custom_call.1} parent=1 // pred_fallthru
      _
    // Predicated region
    $region26: #{tpu_custom_call.1} parent=1 // pred_check
      _
    $region27: #{tpu_custom_call.1} parent=1 // pred_check_branch
      %80 = sbr.rel (0) target = $region29
    $region28: #{tpu_custom_call.1} parent=1 // pred_region
      %81 = dma.done [#allocation4], 128
    $region29: #{tpu_custom_call.1} parent=1 // pred_fallthru
      _
    %82 = vsyncpa [#allocation3], 1
    %83 = vsyncpa [#allocation6], 1
    %84 = vsyncpa [#allocation4], 1

</llo_original>
